<compile_context>
chip_gen: v6e
topology: v6e:2x2x1
jax: 0.10.0
libtpu: 0.0.40
codegen_flags: <defaults>
</compile_context>

<pallas_src>
import functools
import math

import jax
import jax.numpy as jnp
import numpy as np
from jax.experimental import pallas as pl
from jax.experimental.pallas import tpu as pltpu


def resblock_kernel(x_ref, idx_ref, w1_ref, b1_ref, w2_ref, b2_ref, out_ref, *,
                    res_scale, H, W, R, halo, k, mxu_dtype):
    # x_ref  : (1, 1, C_pad, HWs)   one image strip (R + 2*halo rows; flat spatial
    #                               on lanes, channels on sublanes), f32
    # idx_ref: (2, 1, HWs) int32    [0] strip-local row index, [1] column index
    # w*_ref : (k, C_pad, k*C_pad)  per-kernel-row im2col weights, mxu_dtype
    # b*_ref : (C_pad, 1)           bias column, f32
    # out_ref: (1, C_pad, R*W)      this strip's R output rows (halo dropped)
    HWs = x_ref.shape[-1]
    x = x_ref[0, 0]                                    # (C_pad, HWs) f32
    s = pl.program_id(1)                               # strip index

    # ---- boolean border masks, built in-kernel (no per-tap mask DMA) --------
    row_l = idx_ref[0]                                 # (1, HWs) strip-local row
    col_l = idx_ref[1]                                 # (1, HWs) column
    img_row = s * R + row_l - halo                     # global image row of position

    offs = list(range(-(k // 2), k // 2 + 1))

    def rng_mask(idx, o, n):                           # valid iff 0 <= idx + o < n
        if o == 0:
            return None                                # centre offset: always valid
        return (idx >= -o) & (idx <= n - 1 - o)

    hmask = {o: rng_mask(col_l, o, W) for o in offs}     # left/right image border
    vmask = {o: rng_mask(img_row, o, H) for o in offs}   # top/bottom image border

    def combine(a, b):
        if a is None:
            return b
        if b is None:
            return a
        return a & b

    def conv(src_f32, w_ref, b_ref, use_vmask):
        # Cast ONCE, before the rolls / selects (halves roll/select/store traffic).
        src = src_f32.astype(mxu_dtype)
        acc = None
        for dy, oy in enumerate(offs):
            taps = []
            for ox in offs:
                shift = (-(oy * W + ox)) % HWs
                t = pltpu.roll(src, shift, 1) if shift else src
                m = combine(vmask[oy], hmask[ox]) if use_vmask else hmask[ox]
                if m is not None:                      # centre tap: no masking at all
                    t = jnp.where(m, t, 0)
                taps.append(t)
            # One kernel-row group (k*C_pad, HWs) -- never the full 9-tap patch.
            patch = jnp.concatenate(taps, axis=0)
            d = jnp.dot(w_ref[dy], patch, preferred_element_type=jnp.float32)
            acc = d if acc is None else acc + d
        return acc + b_ref[...]                        # bias in f32

    # conv1 needs no vertical masks: out-of-image rows are physical zero rows in
    # the halo'd strip buffer.  conv2 masks its top/bottom border taps because h
    # outside the image is non-zero (bias/ReLU) but must act as conv2's zero pad.
    h = jnp.maximum(conv(x, w1_ref, b1_ref, use_vmask=False), 0.0)   # ReLU in f32
    r = conv(h, w2_ref, b2_ref, use_vmask=True)

    lo = halo * W                                      # drop the halo rows
    x_c = x[:, lo:lo + R * W]
    r_c = r[:, lo:lo + R * W]
    out_ref[0] = (x_c + res_scale * r_c).astype(out_ref.dtype)       # residual in f32


def resblock_pallas(x_nchw, w1_oihw, b1, w2_oihw, b2, res_scale=1.0,
                    mxu_dtype=jnp.bfloat16, rows_per_strip=None):
    """EDSR ResBlock forward.  x: (N,C,H,W) NCHW; w: (Cout,Cin,kh,kw) OIHW; b: (C,)."""
    N, C, H, W = x_nchw.shape
    k = w1_oihw.shape[2]
    halo = 2 * (k // 2)                               # two stacked convs -> 2-row halo
    C_pad = -(-C // 8) * 8                            # sublane-aligned channels

    # ---- rows-per-strip R: VMEM budget, with R*W a multiple of 128 ----------
    lane_step = 128 // math.gcd(W, 128)               # min rows with R*W % 128 == 0
    if rows_per_strip is not None:
        R = max(1, int(rows_per_strip))
    else:
        budget = 6 * 1024 * 1024                      # conservative for v7x (64 MiB VMEM)
        per_row = 7 * 4 * C_pad * W                   # ~7 f32-sized copies of one row
        R = max(1, budget // per_row - 2 * halo)
    if R < H:
        R = max(lane_step, (R // lane_step) * lane_step)
    if R >= H or (R * W) % 128 != 0:
        R = H                                         # single strip (block = full dim)
    S = -(-H // R)                                    # number of strips
    Hp = S * R                                        # padded row count (>= H)
    HWs = (R + 2 * halo) * W                          # flat strip length incl. halo

    # ---- XLA-side layout prep (done once, outside the kernel) ---------------
    x_f32 = x_nchw.astype(jnp.float32)
    if C_pad != C:
        x_f32 = jnp.pad(x_f32, ((0, 0), (0, C_pad - C), (0, 0), (0, 0)))
    # Zero halo rows top/bottom (+ round-up rows): they implement conv1's zero pad.
    xp = jnp.pad(x_f32, ((0, 0), (0, 0), (halo, halo + Hp - H), (0, 0)))
    if S == 1:
        x_strips = xp.reshape(N, 1, C_pad, HWs)
    else:
        rows = jnp.arange(S)[:, None] * R + jnp.arange(R + 2 * halo)[None, :]
        x_strips = xp[:, :, rows, :]                              # (N,C_pad,S,R+2h,W)
        x_strips = jnp.transpose(x_strips, (0, 2, 1, 3, 4)).reshape(N, S, C_pad, HWs)

    def prep_w(w):                                    # OIHW -> (k, C_pad, k*C_pad)
        w_t = jnp.transpose(w, (2, 0, 3, 1))          # (kh, Cout, kw, Cin)
        if C_pad != C:
            w_t = jnp.pad(w_t, ((0, 0), (0, C_pad - C), (0, 0), (0, C_pad - C)))
        return w_t.reshape(k, C_pad, k * C_pad).astype(mxu_dtype)

    def prep_b(b):
        b = b.astype(jnp.float32)
        if C_pad != C:
            b = jnp.pad(b, (0, C_pad - C))
        return b.reshape(C_pad, 1)

    w1m, w2m = prep_w(w1_oihw), prep_w(w2_oihw)
    b1m, b2m = prep_b(b1), prep_b(b2)

    # Strip-local (row, col) index of every flat position; strip-invariant, DMA'd
    # once and reused by every grid step (replaces the old 9-tap mask input).
    rr = np.repeat(np.arange(R + 2 * halo, dtype=np.int32), W)
    cc = np.tile(np.arange(W, dtype=np.int32), R + 2 * halo)
    idx = jnp.asarray(np.stack([rr, cc]).reshape(2, 1, HWs))

    kernel = functools.partial(resblock_kernel, res_scale=float(res_scale),
                               H=H, W=W, R=R, halo=halo, k=k, mxu_dtype=mxu_dtype)

    out = pl.pallas_call(
        kernel,
        out_shape=jax.ShapeDtypeStruct((N, C_pad, Hp * W), x_nchw.dtype),
        grid=(N, S),
        in_specs=[
            pl.BlockSpec((1, 1, C_pad, HWs), lambda n, s: (n, s, 0, 0)),
            pl.BlockSpec((2, 1, HWs), lambda n, s: (0, 0, 0)),
            pl.BlockSpec((k, C_pad, k * C_pad), lambda n, s: (0, 0, 0)),
            pl.BlockSpec((C_pad, 1), lambda n, s: (0, 0)),
            pl.BlockSpec((k, C_pad, k * C_pad), lambda n, s: (0, 0, 0)),
            pl.BlockSpec((C_pad, 1), lambda n, s: (0, 0)),
        ],
        out_specs=pl.BlockSpec((1, C_pad, R * W), lambda n, s: (n, 0, s)),
        compiler_params=pltpu.CompilerParams(
            dimension_semantics=("parallel", "parallel"),
            vmem_limit_bytes=32 * 1024 * 1024),
    )(x_strips, idx, w1m, b1m, w2m, b2m)

    if C_pad != C or Hp != H:                         # no-op for aligned real sizes
        out = out[:, :C, :H * W]
    return out.reshape(N, C, H, W)


def resblock_reference(x_nchw, w1, b1, w2, b2, res_scale=1.0):
    """Pure-JAX reference (lax conv, NCHW/OIHW like PyTorch)."""
    def conv(h, w, b):
        y = jax.lax.conv_general_dilated(
            h, w, window_strides=(1, 1), padding="SAME",
            dimension_numbers=("NCHW", "OIHW", "NCHW"))
        return y + b.reshape(1, -1, 1, 1)

    h = jax.nn.relu(conv(x_nchw, w1, b1))
    h = conv(h, w2, b2)
    return x_nchw + res_scale * h


if __name__ == "__main__":
    # Small shapes consistent with the module: batch=2, n_feats=4, 16x16 spatial.
    N, C, H, W = 2, 4, 16, 16
    res_scale = 1.0

    key = jax.random.PRNGKey(0)
    kx, kw1, kb1, kw2, kb2 = jax.random.split(key, 5)

    x = jax.random.normal(kx, (N, C, H, W), jnp.float32)            # NCHW
    w1 = jax.random.normal(kw1, (C, C, 3, 3), jnp.float32) * 0.1     # OIHW
    b1 = jax.random.normal(kb1, (C,), jnp.float32) * 0.1
    w2 = jax.random.normal(kw2, (C, C, 3, 3), jnp.float32) * 0.1
    b2 = jax.random.normal(kb2, (C,), jnp.float32) * 0.1

    ref = jax.block_until_ready(resblock_reference(x, w1, b1, w2, b2, res_scale))

    # Exact-semantics check with f32 MXU operands, forcing TWO spatial strips so
    # the halo / strip-edge mask machinery is exercised.
    out_f32 = jax.block_until_ready(
        resblock_pallas(x, w1, b1, w2, b2, res_scale,
                        mxu_dtype=jnp.float32, rows_per_strip=8))
    np.testing.assert_allclose(np.asarray(out_f32), np.asarray(ref),
                               rtol=1e-4, atol=1e-4)

    # Performance configuration: bf16 MXU operands (cast before the rolls), f32
    # accumulation / bias / ReLU / residual; default strip heuristic collapses
    # this tiny shape to a single strip per image.
    out_bf16 = jax.block_until_ready(
        resblock_pallas(x, w1, b1, w2, b2, res_scale, mxu_dtype=jnp.bfloat16))
    np.testing.assert_allclose(np.asarray(out_bf16), np.asarray(ref),
                               rtol=5e-2, atol=5e-2)

    print("KERNEL_OK")
</pallas_src>

<mosaic_0001>
module attributes {stable_mosaic.version = 11 : i64} {
  func.func @resblock_kernel(%arg0: i32, %arg1: i32, %arg2: memref<1x1x8x192xf32, #tpu.memory_space<vmem>>, %arg3: memref<2x1x192xi32, #tpu.memory_space<vmem>>, %arg4: memref<3x8x24xf32, #tpu.memory_space<vmem>>, %arg5: memref<8x1xf32, #tpu.memory_space<vmem>>, %arg6: memref<3x8x24xf32, #tpu.memory_space<vmem>>, %arg7: memref<8x1xf32, #tpu.memory_space<vmem>>, %arg8: memref<1x8x128xf32, #tpu.memory_space<vmem>>) attributes {dimension_semantics = [#tpu.dimension_semantics<parallel>, #tpu.dimension_semantics<parallel>], iteration_bounds = array<i64: 2, 2>, scalar_prefetch = 0 : i64, scratch_operands = 0 : i64, tpu.core_type = #tpu.core_type<tc>, window_params = [{transform_indices = @transform_0, window_bounds = array<i64: 1, 1, 8, 192>}, {pipeline_mode = #tpu.pipeline_mode<synchronous>, transform_indices = @transform_1, window_bounds = array<i64: 2, 1, 192>}, {pipeline_mode = #tpu.pipeline_mode<synchronous>, transform_indices = @transform_2, window_bounds = array<i64: 3, 8, 24>}, {pipeline_mode = #tpu.pipeline_mode<synchronous>, transform_indices = @transform_3, window_bounds = array<i64: 8, 1>}, {pipeline_mode = #tpu.pipeline_mode<synchronous>, transform_indices = @transform_4, window_bounds = array<i64: 3, 8, 24>}, {pipeline_mode = #tpu.pipeline_mode<synchronous>, transform_indices = @transform_5, window_bounds = array<i64: 8, 1>}, {transform_indices = @transform_6, window_bounds = array<i64: 1, 8, 128>}]} {
    %c0 = arith.constant 0 : index
    %c0_0 = arith.constant 0 : index
    %c0_1 = arith.constant 0 : index
    %c0_2 = arith.constant 0 : index
    %0 = vector.load %arg2[%c0, %c0_0, %c0_1, %c0_2] : memref<1x1x8x192xf32, #tpu.memory_space<vmem>>, vector<1x1x8x192xf32>
    %1 = vector.shape_cast %0 : vector<1x1x8x192xf32> to vector<8x192xf32>
    %c0_3 = arith.constant 0 : index
    %c0_4 = arith.constant 0 : index
    %c0_5 = arith.constant 0 : index
    %2 = vector.load %arg3[%c0_3, %c0_4, %c0_5] : memref<2x1x192xi32, #tpu.memory_space<vmem>>, vector<1x1x192xi32>
    %3 = vector.shape_cast %2 : vector<1x1x192xi32> to vector<1x192xi32>
    %c1 = arith.constant 1 : index
    %c0_6 = arith.constant 0 : index
    %c0_7 = arith.constant 0 : index
    %4 = vector.load %arg3[%c1, %c0_6, %c0_7] : memref<2x1x192xi32, #tpu.memory_space<vmem>>, vector<1x1x192xi32>
    %5 = vector.shape_cast %4 : vector<1x1x192xi32> to vector<1x192xi32>
    %c8_i32 = arith.constant 8 : i32
    %6 = arith.muli %arg1, %c8_i32 : i32
    %7 = vector.broadcast %6 : i32 to vector<1x192xi32>
    %8 = arith.addi %7, %3 : vector<1x192xi32>
    %c2_i32 = arith.constant 2 : i32
    %9 = vector.broadcast %c2_i32 : i32 to vector<1x192xi32>
    %10 = arith.subi %8, %9 : vector<1x192xi32>
    %c1_i32 = arith.constant 1 : i32
    %11 = vector.broadcast %c1_i32 : i32 to vector<1x192xi32>
    %12 = arith.cmpi sge, %5, %11 : vector<1x192xi32>
    %c16_i32 = arith.constant 16 : i32
    %13 = vector.broadcast %c16_i32 : i32 to vector<1x192xi32>
    %14 = arith.cmpi sle, %5, %13 : vector<1x192xi32>
    %15 = arith.andi %12, %14 : vector<1x192xi1>
    %c-1_i32 = arith.constant -1 : i32
    %16 = vector.broadcast %c-1_i32 : i32 to vector<1x192xi32>
    %17 = arith.cmpi sge, %5, %16 : vector<1x192xi32>
    %c14_i32 = arith.constant 14 : i32
    %18 = vector.broadcast %c14_i32 : i32 to vector<1x192xi32>
    %19 = arith.cmpi sle, %5, %18 : vector<1x192xi32>
    %20 = arith.andi %17, %19 : vector<1x192xi1>
    %c1_i32_8 = arith.constant 1 : i32
    %21 = vector.broadcast %c1_i32_8 : i32 to vector<1x192xi32>
    %22 = arith.cmpi sge, %10, %21 : vector<1x192xi32>
    %c16_i32_9 = arith.constant 16 : i32
    %23 = vector.broadcast %c16_i32_9 : i32 to vector<1x192xi32>
    %24 = arith.cmpi sle, %10, %23 : vector<1x192xi32>
    %25 = arith.andi %22, %24 : vector<1x192xi1>
    %c-1_i32_10 = arith.constant -1 : i32
    %26 = vector.broadcast %c-1_i32_10 : i32 to vector<1x192xi32>
    %27 = arith.cmpi sge, %10, %26 : vector<1x192xi32>
    %c14_i32_11 = arith.constant 14 : i32
    %28 = vector.broadcast %c14_i32_11 : i32 to vector<1x192xi32>
    %29 = arith.cmpi sle, %10, %28 : vector<1x192xi32>
    %30 = arith.andi %27, %29 : vector<1x192xi1>
    %c17_i32 = arith.constant 17 : i32
    %31 = tpu.dynamic_rotate %1 by %c17_i32 dim 1 : vector<8x192xf32>, i32 -> vector<8x192xf32>
    %c0_i32 = arith.constant 0 : i32
    %32 = arith.sitofp %c0_i32 : i32 to f32
    %33 = vector.shape_cast %15 : vector<1x192xi1> to vector<1x192xi1>
    %34 = vector.broadcast %33 : vector<1x192xi1> to vector<8x192xi1>
    %35 = vector.broadcast %32 : f32 to vector<8x192xf32>
    %36 = arith.select %34, %31, %35 : vector<8x192xi1>, vector<8x192xf32>
    %c16_i32_12 = arith.constant 16 : i32
    %37 = tpu.dynamic_rotate %1 by %c16_i32_12 dim 1 : vector<8x192xf32>, i32 -> vector<8x192xf32>
    %c15_i32 = arith.constant 15 : i32
    %38 = tpu.dynamic_rotate %1 by %c15_i32 dim 1 : vector<8x192xf32>, i32 -> vector<8x192xf32>
    %c0_i32_13 = arith.constant 0 : i32
    %39 = arith.sitofp %c0_i32_13 : i32 to f32
    %40 = vector.shape_cast %20 : vector<1x192xi1> to vector<1x192xi1>
    %41 = vector.broadcast %40 : vector<1x192xi1> to vector<8x192xi1>
    %42 = vector.broadcast %39 : f32 to vector<8x192xf32>
    %43 = arith.select %41, %38, %42 : vector<8x192xi1>, vector<8x192xf32>
    %44 = tpu.concatenate %36, %37, %43 in 0 : vector<8x192xf32>, vector<8x192xf32>, vector<8x192xf32> -> vector<24x192xf32>
    %c0_14 = arith.constant 0 : index
    %c0_15 = arith.constant 0 : index
    %c0_16 = arith.constant 0 : index
    %45 = vector.load %arg4[%c0_14, %c0_15, %c0_16] : memref<3x8x24xf32, #tpu.memory_space<vmem>>, vector<1x8x24xf32>
    %46 = vector.shape_cast %45 : vector<1x8x24xf32> to vector<8x24xf32>
    %cst = arith.constant dense<0.000000e+00> : vector<8x192xf32>
    %47 = tpu.matmul %46, %44, %cst {dimension_numbers = #tpu.dot_dimension_numbers<[1], [0], [0], [1], [0, 0, 1, 1], [], []>} : vector<8x24xf32>, vector<24x192xf32>, vector<8x192xf32> -> vector<8x192xf32>
    %c1_i32_17 = arith.constant 1 : i32
    %48 = tpu.dynamic_rotate %1 by %c1_i32_17 dim 1 : vector<8x192xf32>, i32 -> vector<8x192xf32>
    %c0_i32_18 = arith.constant 0 : i32
    %49 = arith.sitofp %c0_i32_18 : i32 to f32
    %50 = vector.shape_cast %15 : vector<1x192xi1> to vector<1x192xi1>
    %51 = vector.broadcast %50 : vector<1x192xi1> to vector<8x192xi1>
    %52 = vector.broadcast %49 : f32 to vector<8x192xf32>
    %53 = arith.select %51, %48, %52 : vector<8x192xi1>, vector<8x192xf32>
    %c191_i32 = arith.constant 191 : i32
    %54 = tpu.dynamic_rotate %1 by %c191_i32 dim 1 : vector<8x192xf32>, i32 -> vector<8x192xf32>
    %c0_i32_19 = arith.constant 0 : i32
    %55 = arith.sitofp %c0_i32_19 : i32 to f32
    %56 = vector.shape_cast %20 : vector<1x192xi1> to vector<1x192xi1>
    %57 = vector.broadcast %56 : vector<1x192xi1> to vector<8x192xi1>
    %58 = vector.broadcast %55 : f32 to vector<8x192xf32>
    %59 = arith.select %57, %54, %58 : vector<8x192xi1>, vector<8x192xf32>
    %60 = tpu.concatenate %53, %1, %59 in 0 : vector<8x192xf32>, vector<8x192xf32>, vector<8x192xf32> -> vector<24x192xf32>
    %c1_20 = arith.constant 1 : index
    %c0_21 = arith.constant 0 : index
    %c0_22 = arith.constant 0 : index
    %61 = vector.load %arg4[%c1_20, %c0_21, %c0_22] : memref<3x8x24xf32, #tpu.memory_space<vmem>>, vector<1x8x24xf32>
    %62 = vector.shape_cast %61 : vector<1x8x24xf32> to vector<8x24xf32>
    %cst_23 = arith.constant dense<0.000000e+00> : vector<8x192xf32>
    %63 = tpu.matmul %62, %60, %cst_23 {dimension_numbers = #tpu.dot_dimension_numbers<[1], [0], [0], [1], [0, 0, 1, 1], [], []>} : vector<8x24xf32>, vector<24x192xf32>, vector<8x192xf32> -> vector<8x192xf32>
    %64 = arith.addf %47, %63 : vector<8x192xf32>
    %c177_i32 = arith.constant 177 : i32
    %65 = tpu.dynamic_rotate %1 by %c177_i32 dim 1 : vector<8x192xf32>, i32 -> vector<8x192xf32>
    %c0_i32_24 = arith.constant 0 : i32
    %66 = arith.sitofp %c0_i32_24 : i32 to f32
    %67 = vector.shape_cast %15 : vector<1x192xi1> to vector<1x192xi1>
    %68 = vector.broadcast %67 : vector<1x192xi1> to vector<8x192xi1>
    %69 = vector.broadcast %66 : f32 to vector<8x192xf32>
    %70 = arith.select %68, %65, %69 : vector<8x192xi1>, vector<8x192xf32>
    %c176_i32 = arith.constant 176 : i32
    %71 = tpu.dynamic_rotate %1 by %c176_i32 dim 1 : vector<8x192xf32>, i32 -> vector<8x192xf32>
    %c175_i32 = arith.constant 175 : i32
    %72 = tpu.dynamic_rotate %1 by %c175_i32 dim 1 : vector<8x192xf32>, i32 -> vector<8x192xf32>
    %c0_i32_25 = arith.constant 0 : i32
    %73 = arith.sitofp %c0_i32_25 : i32 to f32
    %74 = vector.shape_cast %20 : vector<1x192xi1> to vector<1x192xi1>
    %75 = vector.broadcast %74 : vector<1x192xi1> to vector<8x192xi1>
    %76 = vector.broadcast %73 : f32 to vector<8x192xf32>
    %77 = arith.select %75, %72, %76 : vector<8x192xi1>, vector<8x192xf32>
    %78 = tpu.concatenate %70, %71, %77 in 0 : vector<8x192xf32>, vector<8x192xf32>, vector<8x192xf32> -> vector<24x192xf32>
    %c2 = arith.constant 2 : index
    %c0_26 = arith.constant 0 : index
    %c0_27 = arith.constant 0 : index
    %79 = vector.load %arg4[%c2, %c0_26, %c0_27] : memref<3x8x24xf32, #tpu.memory_space<vmem>>, vector<1x8x24xf32>
    %80 = vector.shape_cast %79 : vector<1x8x24xf32> to vector<8x24xf32>
    %cst_28 = arith.constant dense<0.000000e+00> : vector<8x192xf32>
    %81 = tpu.matmul %80, %78, %cst_28 {dimension_numbers = #tpu.dot_dimension_numbers<[1], [0], [0], [1], [0, 0, 1, 1], [], []>} : vector<8x24xf32>, vector<24x192xf32>, vector<8x192xf32> -> vector<8x192xf32>
    %82 = arith.addf %64, %81 : vector<8x192xf32>
    %c0_29 = arith.constant 0 : index
    %c0_30 = arith.constant 0 : index
    %83 = vector.load %arg5[%c0_29, %c0_30] : memref<8x1xf32, #tpu.memory_space<vmem>>, vector<8x1xf32>
    %84 = vector.broadcast %83 : vector<8x1xf32> to vector<8x192xf32>
    %85 = arith.addf %82, %84 : vector<8x192xf32>
    %cst_31 = arith.constant 0.000000e+00 : f32
    %86 = vector.broadcast %cst_31 : f32 to vector<8x192xf32>
    %87 = arith.maximumf %85, %86 : vector<8x192xf32>
    %c17_i32_32 = arith.constant 17 : i32
    %88 = tpu.dynamic_rotate %87 by %c17_i32_32 dim 1 : vector<8x192xf32>, i32 -> vector<8x192xf32>
    %89 = arith.andi %25, %15 : vector<1x192xi1>
    %c0_i32_33 = arith.constant 0 : i32
    %90 = arith.sitofp %c0_i32_33 : i32 to f32
    %91 = vector.shape_cast %89 : vector<1x192xi1> to vector<1x192xi1>
    %92 = vector.broadcast %91 : vector<1x192xi1> to vector<8x192xi1>
    %93 = vector.broadcast %90 : f32 to vector<8x192xf32>
    %94 = arith.select %92, %88, %93 : vector<8x192xi1>, vector<8x192xf32>
    %c16_i32_34 = arith.constant 16 : i32
    %95 = tpu.dynamic_rotate %87 by %c16_i32_34 dim 1 : vector<8x192xf32>, i32 -> vector<8x192xf32>
    %c0_i32_35 = arith.constant 0 : i32
    %96 = arith.sitofp %c0_i32_35 : i32 to f32
    %97 = vector.shape_cast %25 : vector<1x192xi1> to vector<1x192xi1>
    %98 = vector.broadcast %97 : vector<1x192xi1> to vector<8x192xi1>
    %99 = vector.broadcast %96 : f32 to vector<8x192xf32>
    %100 = arith.select %98, %95, %99 : vector<8x192xi1>, vector<8x192xf32>
    %c15_i32_36 = arith.constant 15 : i32
    %101 = tpu.dynamic_rotate %87 by %c15_i32_36 dim 1 : vector<8x192xf32>, i32 -> vector<8x192xf32>
    %102 = arith.andi %25, %20 : vector<1x192xi1>
    %c0_i32_37 = arith.constant 0 : i32
    %103 = arith.sitofp %c0_i32_37 : i32 to f32
    %104 = vector.shape_cast %102 : vector<1x192xi1> to vector<1x192xi1>
    %105 = vector.broadcast %104 : vector<1x192xi1> to vector<8x192xi1>
    %106 = vector.broadcast %103 : f32 to vector<8x192xf32>
    %107 = arith.select %105, %101, %106 : vector<8x192xi1>, vector<8x192xf32>
    %108 = tpu.concatenate %94, %100, %107 in 0 : vector<8x192xf32>, vector<8x192xf32>, vector<8x192xf32> -> vector<24x192xf32>
    %c0_38 = arith.constant 0 : index
    %c0_39 = arith.constant 0 : index
    %c0_40 = arith.constant 0 : index
    %109 = vector.load %arg6[%c0_38, %c0_39, %c0_40] : memref<3x8x24xf32, #tpu.memory_space<vmem>>, vector<1x8x24xf32>
    %110 = vector.shape_cast %109 : vector<1x8x24xf32> to vector<8x24xf32>
    %cst_41 = arith.constant dense<0.000000e+00> : vector<8x192xf32>
    %111 = tpu.matmul %110, %108, %cst_41 {dimension_numbers = #tpu.dot_dimension_numbers<[1], [0], [0], [1], [0, 0, 1, 1], [], []>} : vector<8x24xf32>, vector<24x192xf32>, vector<8x192xf32> -> vector<8x192xf32>
    %c1_i32_42 = arith.constant 1 : i32
    %112 = tpu.dynamic_rotate %87 by %c1_i32_42 dim 1 : vector<8x192xf32>, i32 -> vector<8x192xf32>
    %c0_i32_43 = arith.constant 0 : i32
    %113 = arith.sitofp %c0_i32_43 : i32 to f32
    %114 = vector.shape_cast %15 : vector<1x192xi1> to vector<1x192xi1>
    %115 = vector.broadcast %114 : vector<1x192xi1> to vector<8x192xi1>
    %116 = vector.broadcast %113 : f32 to vector<8x192xf32>
    %117 = arith.select %115, %112, %116 : vector<8x192xi1>, vector<8x192xf32>
    %c191_i32_44 = arith.constant 191 : i32
    %118 = tpu.dynamic_rotate %87 by %c191_i32_44 dim 1 : vector<8x192xf32>, i32 -> vector<8x192xf32>
    %c0_i32_45 = arith.constant 0 : i32
    %119 = arith.sitofp %c0_i32_45 : i32 to f32
    %120 = vector.shape_cast %20 : vector<1x192xi1> to vector<1x192xi1>
    %121 = vector.broadcast %120 : vector<1x192xi1> to vector<8x192xi1>
    %122 = vector.broadcast %119 : f32 to vector<8x192xf32>
    %123 = arith.select %121, %118, %122 : vector<8x192xi1>, vector<8x192xf32>
    %124 = tpu.concatenate %117, %87, %123 in 0 : vector<8x192xf32>, vector<8x192xf32>, vector<8x192xf32> -> vector<24x192xf32>
    %c1_46 = arith.constant 1 : index
    %c0_47 = arith.constant 0 : index
    %c0_48 = arith.constant 0 : index
    %125 = vector.load %arg6[%c1_46, %c0_47, %c0_48] : memref<3x8x24xf32, #tpu.memory_space<vmem>>, vector<1x8x24xf32>
    %126 = vector.shape_cast %125 : vector<1x8x24xf32> to vector<8x24xf32>
    %cst_49 = arith.constant dense<0.000000e+00> : vector<8x192xf32>
    %127 = tpu.matmul %126, %124, %cst_49 {dimension_numbers = #tpu.dot_dimension_numbers<[1], [0], [0], [1], [0, 0, 1, 1], [], []>} : vector<8x24xf32>, vector<24x192xf32>, vector<8x192xf32> -> vector<8x192xf32>
    %128 = arith.addf %111, %127 : vector<8x192xf32>
    %c177_i32_50 = arith.constant 177 : i32
    %129 = tpu.dynamic_rotate %87 by %c177_i32_50 dim 1 : vector<8x192xf32>, i32 -> vector<8x192xf32>
    %130 = arith.andi %30, %15 : vector<1x192xi1>
    %c0_i32_51 = arith.constant 0 : i32
    %131 = arith.sitofp %c0_i32_51 : i32 to f32
    %132 = vector.shape_cast %130 : vector<1x192xi1> to vector<1x192xi1>
    %133 = vector.broadcast %132 : vector<1x192xi1> to vector<8x192xi1>
    %134 = vector.broadcast %131 : f32 to vector<8x192xf32>
    %135 = arith.select %133, %129, %134 : vector<8x192xi1>, vector<8x192xf32>
    %c176_i32_52 = arith.constant 176 : i32
    %136 = tpu.dynamic_rotate %87 by %c176_i32_52 dim 1 : vector<8x192xf32>, i32 -> vector<8x192xf32>
    %c0_i32_53 = arith.constant 0 : i32
    %137 = arith.sitofp %c0_i32_53 : i32 to f32
    %138 = vector.shape_cast %30 : vector<1x192xi1> to vector<1x192xi1>
    %139 = vector.broadcast %138 : vector<1x192xi1> to vector<8x192xi1>
    %140 = vector.broadcast %137 : f32 to vector<8x192xf32>
    %141 = arith.select %139, %136, %140 : vector<8x192xi1>, vector<8x192xf32>
    %c175_i32_54 = arith.constant 175 : i32
    %142 = tpu.dynamic_rotate %87 by %c175_i32_54 dim 1 : vector<8x192xf32>, i32 -> vector<8x192xf32>
    %143 = arith.andi %30, %20 : vector<1x192xi1>
    %c0_i32_55 = arith.constant 0 : i32
    %144 = arith.sitofp %c0_i32_55 : i32 to f32
    %145 = vector.shape_cast %143 : vector<1x192xi1> to vector<1x192xi1>
    %146 = vector.broadcast %145 : vector<1x192xi1> to vector<8x192xi1>
    %147 = vector.broadcast %144 : f32 to vector<8x192xf32>
    %148 = arith.select %146, %142, %147 : vector<8x192xi1>, vector<8x192xf32>
    %149 = tpu.concatenate %135, %141, %148 in 0 : vector<8x192xf32>, vector<8x192xf32>, vector<8x192xf32> -> vector<24x192xf32>
    %c2_56 = arith.constant 2 : index
    %c0_57 = arith.constant 0 : index
    %c0_58 = arith.constant 0 : index
    %150 = vector.load %arg6[%c2_56, %c0_57, %c0_58] : memref<3x8x24xf32, #tpu.memory_space<vmem>>, vector<1x8x24xf32>
    %151 = vector.shape_cast %150 : vector<1x8x24xf32> to vector<8x24xf32>
    %cst_59 = arith.constant dense<0.000000e+00> : vector<8x192xf32>
    %152 = tpu.matmul %151, %149, %cst_59 {dimension_numbers = #tpu.dot_dimension_numbers<[1], [0], [0], [1], [0, 0, 1, 1], [], []>} : vector<8x24xf32>, vector<24x192xf32>, vector<8x192xf32> -> vector<8x192xf32>
    %153 = arith.addf %128, %152 : vector<8x192xf32>
    %c0_60 = arith.constant 0 : index
    %c0_61 = arith.constant 0 : index
    %154 = vector.load %arg7[%c0_60, %c0_61] : memref<8x1xf32, #tpu.memory_space<vmem>>, vector<8x1xf32>
    %155 = vector.broadcast %154 : vector<8x1xf32> to vector<8x192xf32>
    %156 = arith.addf %153, %155 : vector<8x192xf32>
    %157 = vector.extract_strided_slice %1 {offsets = [0, 32], sizes = [8, 128], strides = [1, 1]} : vector<8x192xf32> to vector<8x128xf32>
    %158 = vector.extract_strided_slice %156 {offsets = [0, 32], sizes = [8, 128], strides = [1, 1]} : vector<8x192xf32> to vector<8x128xf32>
    %cst_62 = arith.constant 1.000000e+00 : f32
    %159 = vector.broadcast %cst_62 : f32 to vector<8x128xf32>
    %160 = arith.mulf %159, %158 : vector<8x128xf32>
    %161 = arith.addf %157, %160 : vector<8x128xf32>
    %c0_63 = arith.constant 0 : index
    %c0_64 = arith.constant 0 : index
    %c0_65 = arith.constant 0 : index
    %162 = vector.load %arg8[%c0_63, %c0_64, %c0_65] : memref<1x8x128xf32, #tpu.memory_space<vmem>>, vector<1x8x128xf32>
    %163 = vector.shape_cast %162 : vector<1x8x128xf32> to vector<8x128xf32>
    %164 = vector.shape_cast %161 : vector<8x128xf32> to vector<1x8x128xf32>
    tpu.vector_store %arg8[%c0_63, %c0_64, %c0_65], %164 {strides = array<i32>} : memref<1x8x128xf32, #tpu.memory_space<vmem>>, vector<1x8x128xf32>,
    return
  }
  func.func @transform_0(%arg0: i32, %arg1: i32) -> (i32, i32, i32, i32) {
    %c0_i32 = arith.constant 0 : i32
    %c0_i32_0 = arith.constant 0 : i32
    %c0_i32_1 = arith.constant 0 : i32
    return %arg0, %arg1, %c0_i32, %c0_i32_0 : i32, i32, i32, i32
  }
  func.func @transform_1(%arg0: i32, %arg1: i32) -> (i32, i32, i32) {
    %c0_i32 = arith.constant 0 : i32
    %c0_i32_0 = arith.constant 0 : i32
    %c0_i32_1 = arith.constant 0 : i32
    %c0_i32_2 = arith.constant 0 : i32
    return %c0_i32, %c0_i32_0, %c0_i32_1 : i32, i32, i32
  }
  func.func @transform_2(%arg0: i32, %arg1: i32) -> (i32, i32, i32) {
    %c0_i32 = arith.constant 0 : i32
    %c0_i32_0 = arith.constant 0 : i32
    %c0_i32_1 = arith.constant 0 : i32
    %c0_i32_2 = arith.constant 0 : i32
    return %c0_i32, %c0_i32_0, %c0_i32_1 : i32, i32, i32
  }
  func.func @transform_3(%arg0: i32, %arg1: i32) -> (i32, i32) {
    %c0_i32 = arith.constant 0 : i32
    %c0_i32_0 = arith.constant 0 : i32
    %c0_i32_1 = arith.constant 0 : i32
    return %c0_i32, %c0_i32_0 : i32, i32
  }
  func.func @transform_4(%arg0: i32, %arg1: i32) -> (i32, i32, i32) {
    %c0_i32 = arith.constant 0 : i32
    %c0_i32_0 = arith.constant 0 : i32
    %c0_i32_1 = arith.constant 0 : i32
    %c0_i32_2 = arith.constant 0 : i32
    return %c0_i32, %c0_i32_0, %c0_i32_1 : i32, i32, i32
  }
  func.func @transform_5(%arg0: i32, %arg1: i32) -> (i32, i32) {
    %c0_i32 = arith.constant 0 : i32
    %c0_i32_0 = arith.constant 0 : i32
    %c0_i32_1 = arith.constant 0 : i32
    return %c0_i32, %c0_i32_0 : i32, i32
  }
  func.func @transform_6(%arg0: i32, %arg1: i32) -> (i32, i32, i32) {
    %c0_i32 = arith.constant 0 : i32
    %c0_i32_0 = arith.constant 0 : i32
    return %arg0, %c0_i32, %arg1 : i32, i32, i32
  }
}

</mosaic_0001>

<llo_original>
// kernel: tpu_custom_call.1
$region0: #{tpu_custom_call.1}
  #allocation0 [shape = 'u32[]', space=smem, size = 0x4, offset = 0x4, fixed_abs, tag = 'smem constant byte address 0x4 - core index']
  #allocation1 [shape = 'u32[144,128]{1,0:T(1,128)}', space=vmem, size = 0x12000, scoped, tag = 'internal scratch']
  %s0 = inlined_call_operand.hbm [shape: f32[2,2,8,192], index: 0, kind: input, shape index: {}]
  %s1 = inlined_call_operand.hbm [shape: s32[2,1,192], index: 1, kind: input, shape index: {}]
  %s2 = inlined_call_operand.hbm [shape: f32[3,8,24], index: 2, kind: input, shape index: {}]
  %s3 = inlined_call_operand.vmem [shape: f32[8,1], index: 3, kind: input, shape index: {}]
  %s4 = inlined_call_operand.vmem [shape: f32[3,8,24], index: 4, kind: input, shape index: {}]
  %s5 = inlined_call_operand.vmem [shape: f32[8,1], index: 5, kind: input, shape index: {}]
  %s6 = inlined_call_operand.hbm [shape: f32[2,8,256], index: 6, kind: output, shape index: {}]
  %s7 = sld [smem:[#allocation0]]
  $region69: #{tpu_custom_call.1} parent=0
    _
  %s9 = ssub.s32 1, %s7
  %s10 = scalar_select 0, %s9, %s7
  $region1: #{tpu_custom_call.1} parent=0
    #allocation2 [shape = 'u8[16384]{0}', space=vmem, size = 0x4000, scoped, tag = 'input window, operand 0']
    #allocation3 [shape = 's32[2]{0}', space=sflag, size = 0x8, scoped, tag = 'scoped memory for tpu_custom_call.1']
    #allocation4 [shape = 's32[2]{0}', space=sflag, size = 0x8, scoped, tag = 'scoped memory for tpu_custom_call.1']
    #allocation5 [shape = 'u8[2048]{0}', space=vmem, size = 0x800, scoped, tag = 'input window, operand 1, single buffered']
    #allocation6 [shape = 's32[1]{0}', space=sflag, size = 0x4, scoped, tag = 'scoped memory for tpu_custom_call.1']
    #allocation7 [shape = 'u8[12288]{0}', space=vmem, size = 0x3000, scoped, tag = 'input window, operand 2, single buffered']
    #allocation8 [shape = 'u8[8192]{0}', space=vmem, size = 0x2000, scoped, tag = 'output window, operand 0']
    %11 = vsyncpa [#allocation3], 0
    %s12 = scalar_lea.sflag [#allocation3], 1
    %13 = vsyncpa %s12, 0
    %14 = vsyncpa [#allocation6], 0
    %15 = vsyncpa [#allocation4], 0
    %s16 = scalar_lea.sflag [#allocation4], 1
    %17 = vsyncpa %s16, 0
    loop: start=0, step=1, limit=6
    $region2: #{tpu_custom_call.1} parent=1 // loop_pre_header
      _
    $region3: #{tpu_custom_call.1} parent=1 // loop_header
      %s19 = sphi 0, %s23
      %p20 = scmp.ge.s32.totalorder %s19, 6
      %s26 = sphi 0, %s38
      %s27 = sphi 0, %s34
      %s28 = sphi 0, %s26
      %s29 = sphi 0, %s27
      %s30 = sphi 0, %s28
      %s31 = sphi 0, %s29
      %s43 = sphi 0, %s45
      %s46 = sphi 0, %s43
      %s47 = sphi 0, %s46
      %s63 = sphi 0, %s47
      %s67 = sphi 0, %s67
      %s69 = sphi 0, %s67
      %s70 = sphi 0, %s69
      %s84 = sphi 0, %s70
      %s88 = sphi 0, %s88
      %s90 = sphi 0, %s88
      %s91 = sphi 0, %s90
      %s105 = sphi 0, %s91
      %s109 = sphi 0, %s109
      %s111 = sphi 0, %s109
      %s112 = sphi 0, %s111
      %s126 = sphi 0, %s112
      %s130 = sphi 0, %s130
      %s132 = sphi 0, %s130
      %s133 = sphi 0, %s132
      %s147 = sphi 0, %s133
      %s151 = sphi 0, %s151
      %s153 = sphi 0, %s151
      %s154 = sphi 0, %s153
      %s168 = sphi 0, %s154
      %s176 = sphi 0, %s178
      %s179 = sphi 0, %s176
      %s180 = sphi 0, %s179
      %s196 = sphi 0, %s180
    $region4: #{tpu_custom_call.1} parent=1 // loop_header_branch
      %22 = sbr.rel (%p20) target = $region8
    $region5: #{tpu_custom_call.1} parent=1 // loop_body
      %s24 = ssub.s32 %s19, 1
      %s25 = ssub.s32 %s19, 2
      %s32 = sadd.s32 1, %s27
      %p33 = scmp.ge.s32.totalorder %s32, 2
      %s34 = scalar_select %p33, 0, %s32
      %s35 = sadd.s32 1, %s26
      %s36 = scalar_select %p33, %s35, %s26
      %p37 = scmp.ge.s32.totalorder %s36, 2
      %s38 = scalar_select %p37, 0, %s36
      %s39 = ssub.s32 %s26, %s38
      %s40 = ssub.s32 %s27, %s34
      %s41 = sor.u32 %s39, %s40
      %p42 = scmp.eq.s32.totalorder %s41, 0
      %s44 = sadd.s32 %s43, 1
      %s45 = scalar_select %p42, %s43, %s44
      %p48 = pneg %p42
      %p49 = scmp.eq.s32.totalorder %s19, 3
      %p50 = por %p48, %p49
      %p51 = scmp.ne.s32.totalorder %s43, %s46
      %p52 = scmp.eq.s32.totalorder %s19, 0
      %p53 = por %p51, %p52
      %p54 = scmp.ne.s32.totalorder %s43, %s46
      %p55 = scmp.eq.s32.totalorder %s24, 3
      %p56 = por %p54, %p55
      %p57 = scmp.ne.s32.totalorder %s46, %s47
      %p58 = scmp.eq.s32.totalorder %s24, 0
      %p59 = por %p57, %p58
      %p60 = scmp.ne.s32.totalorder %s46, %s47
      %p61 = scmp.eq.s32.totalorder %s25, 3
      %p62 = por %p60, %p61
      %p64 = scmp.ne.s32.totalorder %s47, %s63
      %p65 = scmp.eq.s32.totalorder %s25, 0
      %p66 = por %p64, %p65
      %s68 = sadd.s32 %s67, 1
      %p71 = scmp.eq.s32.totalorder %s19, 3
      %p72 = scmp.ne.s32.totalorder %s67, %s69
      %p73 = scmp.eq.s32.totalorder %s19, 0
      %p74 = por %p72, %p73
      %p75 = scmp.ne.s32.totalorder %s67, %s69
      %p76 = scmp.eq.s32.totalorder %s24, 3
      %p77 = por %p75, %p76
      %p78 = scmp.ne.s32.totalorder %s69, %s70
      %p79 = scmp.eq.s32.totalorder %s24, 0
      %p80 = por %p78, %p79
      %p81 = scmp.ne.s32.totalorder %s69, %s70
      %p82 = scmp.eq.s32.totalorder %s25, 3
      %p83 = por %p81, %p82
      %p85 = scmp.ne.s32.totalorder %s70, %s84
      %p86 = scmp.eq.s32.totalorder %s25, 0
      %p87 = por %p85, %p86
      %s89 = sadd.s32 %s88, 1
      %p92 = scmp.eq.s32.totalorder %s19, 3
      %p93 = scmp.ne.s32.totalorder %s88, %s90
      %p94 = scmp.eq.s32.totalorder %s19, 0
      %p95 = por %p93, %p94
      %p96 = scmp.ne.s32.totalorder %s88, %s90
      %p97 = scmp.eq.s32.totalorder %s24, 3
      %p98 = por %p96, %p97
      %p99 = scmp.ne.s32.totalorder %s90, %s91
      %p100 = scmp.eq.s32.totalorder %s24, 0
      %p101 = por %p99, %p100
      %p102 = scmp.ne.s32.totalorder %s90, %s91
      %p103 = scmp.eq.s32.totalorder %s25, 3
      %p104 = por %p102, %p103
      %p106 = scmp.ne.s32.totalorder %s91, %s105
      %p107 = scmp.eq.s32.totalorder %s25, 0
      %p108 = por %p106, %p107
      %s110 = sadd.s32 %s109, 1
      %p113 = scmp.eq.s32.totalorder %s19, 3
      %p114 = scmp.ne.s32.totalorder %s109, %s111
      %p115 = scmp.eq.s32.totalorder %s19, 0
      %p116 = por %p114, %p115
      %p117 = scmp.ne.s32.totalorder %s109, %s111
      %p118 = scmp.eq.s32.totalorder %s24, 3
      %p119 = por %p117, %p118
      %p120 = scmp.ne.s32.totalorder %s111, %s112
      %p121 = scmp.eq.s32.totalorder %s24, 0
      %p122 = por %p120, %p121
      %p123 = scmp.ne.s32.totalorder %s111, %s112
      %p124 = scmp.eq.s32.totalorder %s25, 3
      %p125 = por %p123, %p124
      %p127 = scmp.ne.s32.totalorder %s112, %s126
      %p128 = scmp.eq.s32.totalorder %s25, 0
      %p129 = por %p127, %p128
      %s131 = sadd.s32 %s130, 1
      %p134 = scmp.eq.s32.totalorder %s19, 3
      %p135 = scmp.ne.s32.totalorder %s130, %s132
      %p136 = scmp.eq.s32.totalorder %s19, 0
      %p137 = por %p135, %p136
      %p138 = scmp.ne.s32.totalorder %s130, %s132
      %p139 = scmp.eq.s32.totalorder %s24, 3
      %p140 = por %p138, %p139
      %p141 = scmp.ne.s32.totalorder %s132, %s133
      %p142 = scmp.eq.s32.totalorder %s24, 0
      %p143 = por %p141, %p142
      %p144 = scmp.ne.s32.totalorder %s132, %s133
      %p145 = scmp.eq.s32.totalorder %s25, 3
      %p146 = por %p144, %p145
      %p148 = scmp.ne.s32.totalorder %s133, %s147
      %p149 = scmp.eq.s32.totalorder %s25, 0
      %p150 = por %p148, %p149
      %s152 = sadd.s32 %s151, 1
      %p155 = scmp.eq.s32.totalorder %s19, 3
      %p156 = scmp.ne.s32.totalorder %s151, %s153
      %p157 = scmp.eq.s32.totalorder %s19, 0
      %p158 = por %p156, %p157
      %p159 = scmp.ne.s32.totalorder %s151, %s153
      %p160 = scmp.eq.s32.totalorder %s24, 3
      %p161 = por %p159, %p160
      %p162 = scmp.ne.s32.totalorder %s153, %s154
      %p163 = scmp.eq.s32.totalorder %s24, 0
      %p164 = por %p162, %p163
      %p165 = scmp.ne.s32.totalorder %s153, %s154
      %p166 = scmp.eq.s32.totalorder %s25, 3
      %p167 = por %p165, %p166
      %p169 = scmp.ne.s32.totalorder %s154, %s168
      %p170 = scmp.eq.s32.totalorder %s25, 0
      %p171 = por %p169, %p170
      %s172 = ssub.s32 %s26, %s38
      %s173 = ssub.s32 %s27, %s34
      %s174 = sor.u32 %s172, %s173
      %p175 = scmp.eq.s32.totalorder %s174, 0
      %s177 = sadd.s32 %s176, 1
      %s178 = scalar_select %p175, %s176, %s177
      %p181 = pneg %p175
      %p182 = scmp.eq.s32.totalorder %s19, 3
      %p183 = por %p181, %p182
      %p184 = scmp.ne.s32.totalorder %s176, %s179
      %p185 = scmp.eq.s32.totalorder %s19, 0
      %p186 = por %p184, %p185
      %p187 = scmp.ne.s32.totalorder %s176, %s179
      %p188 = scmp.eq.s32.totalorder %s24, 3
      %p189 = por %p187, %p188
      %p190 = scmp.ne.s32.totalorder %s179, %s180
      %p191 = scmp.eq.s32.totalorder %s24, 0
      %p192 = por %p190, %p191
      %p193 = scmp.ne.s32.totalorder %s179, %s180
      %p194 = scmp.eq.s32.totalorder %s25, 3
      %p195 = por %p193, %p194
      %p197 = scmp.ne.s32.totalorder %s180, %s196
      %p198 = scmp.eq.s32.totalorder %s25, 0
      %p199 = por %p197, %p198
      %p200 = scmp.le.s32.totalorder 1, %s19
      %p201 = scmp.lt.s32.totalorder %s19, 5
      %p202 = pnand %p200, %p201
      %p203 = pneg %p202
      // Predicated region
      $region9: #{tpu_custom_call.1} parent=5 // pred_check
        _
      $region10: #{tpu_custom_call.1} parent=5 // pred_check_branch
        %205 = sbr.rel (%p202) target = $region12
      $region11: #{tpu_custom_call.1} parent=5 // pred_region
        %s206 = ssub.s32 %s19, 1
        // Predicated region
        $region13: #{tpu_custom_call.1} parent=11 // pred_check
          %p207 = pneg %p80
        $region14: #{tpu_custom_call.1} parent=11 // pred_check_branch
          %209 = sbr.rel (%p207) target = $region16
        $region15: #{tpu_custom_call.1} parent=11 // pred_region
          %s211 = ssub.s32 64, 64
          %212 = vsyncadd [#allocation6], %s211
          %s213 = sshll.u32 [#allocation5], 4
          %s214 = int_to_ptr.vmem [resolvable:$true] %s213
          %219 = dma.hbm_to_vmem [thread:$0]  %s1, 64, %s214, [#allocation6], 32, 32, 2
        $region16: #{tpu_custom_call.1} parent=11 // pred_fallthru
          _
        // Predicated region
        $region17: #{tpu_custom_call.1} parent=11 // pred_check
          %p220 = pneg %p101
        $region18: #{tpu_custom_call.1} parent=11 // pred_check_branch
          %222 = sbr.rel (%p220) target = $region20
        $region19: #{tpu_custom_call.1} parent=11 // pred_region
          %s224 = ssub.s32 384, 384
          %225 = vsyncadd [#allocation6], %s224
          %s226 = sshll.u32 [#allocation7], 4
          %s227 = int_to_ptr.vmem [resolvable:$true] %s226
          %232 = dma.hbm_to_vmem [thread:$0]  %s2, 384, %s227, [#allocation6], 128, 128, 8
        $region20: #{tpu_custom_call.1} parent=11 // pred_fallthru
          _
        // Predicated region
        $region21: #{tpu_custom_call.1} parent=11 // pred_check
          %p233 = pneg %p122
        $region22: #{tpu_custom_call.1} parent=11 // pred_check_branch
          %235 = sbr.rel (%p233) target = $region24
        $region23: #{tpu_custom_call.1} parent=11 // pred_region
          _
        $region24: #{tpu_custom_call.1} parent=11 // pred_fallthru
          _
        // Predicated region
        $region25: #{tpu_custom_call.1} parent=11 // pred_check
          %p236 = pneg %p143
        $region26: #{tpu_custom_call.1} parent=11 // pred_check_branch
          %238 = sbr.rel (%p236) target = $region28
        $region27: #{tpu_custom_call.1} parent=11 // pred_region
          _
        $region28: #{tpu_custom_call.1} parent=11 // pred_fallthru
          _
        // Predicated region
        $region29: #{tpu_custom_call.1} parent=11 // pred_check
          %p239 = pneg %p164
        $region30: #{tpu_custom_call.1} parent=11 // pred_check_branch
          %241 = sbr.rel (%p239) target = $region32
        $region31: #{tpu_custom_call.1} parent=11 // pred_region
          _
        $region32: #{tpu_custom_call.1} parent=11 // pred_fallthru
          _
      $region12: #{tpu_custom_call.1} parent=5 // pred_fallthru
        _
      %p242 = scmp.lt.s32.totalorder %s19, 4
      // Predicated region
      $region33: #{tpu_custom_call.1} parent=5 // pred_check
        %p243 = pneg %p242
      $region34: #{tpu_custom_call.1} parent=5 // pred_check_branch
        %245 = sbr.rel (%p243) target = $region36
      $region35: #{tpu_custom_call.1} parent=5 // pred_region
        // Predicated region
        $region37: #{tpu_custom_call.1} parent=35 // pred_check
          %p246 = pneg %p53
        $region38: #{tpu_custom_call.1} parent=35 // pred_check_branch
          %248 = sbr.rel (%p246) target = $region40
        $region39: #{tpu_custom_call.1} parent=35 // pred_region
          %s249 = sand.u32 %s43, 1
          %s250 = scalar_lea.sflag [#allocation3], %s249
          %s251 = sand.u32 %s43, 1
          %s252 = smul.addr %s251, 16
          %s253 = scalar_lea.vmem [#allocation2], %s252
          %s255 = ssub.s32 256, 256
          %256 = vsyncadd %s250, %s255
          %s257 = smul.addr %s27, 2
          %s258 = smul.addr %s26, 4
          %s259 = sadd.s32 %s257, %s258
          %s260 = smul.addr %s259, 128
          %s261 = scalar_lea.hbm %s0, %s260
          %s263 = sshll.u32 %s253, 4
          %s264 = int_to_ptr.vmem [resolvable:$true] %s263
          %266 = dma.hbm_to_vmem [thread:$0]  %s261, 256, %s264, %s250
        $region40: #{tpu_custom_call.1} parent=35 // pred_fallthru
          _
      $region36: #{tpu_custom_call.1} parent=5 // pred_fallthru
        _
      %p267 = scmp.le.s32.totalorder 1, %s19
      %p268 = scmp.lt.s32.totalorder %s19, 5
      %p269 = pnand %p267, %p268
      %p270 = pneg %p269
      // Predicated region
      $region41: #{tpu_custom_call.1} parent=5 // pred_check
        _
      $region42: #{tpu_custom_call.1} parent=5 // pred_check_branch
        %272 = sbr.rel (%p269) target = $region44
      $region43: #{tpu_custom_call.1} parent=5 // pred_region
        %s273 = ssub.s32 %s19, 1
        %s274 = sand.u32 %s46, 1
        %s275 = scalar_lea.sflag [#allocation3], %s274
        %s276 = sand.u32 %s46, 1
        %s277 = smul.addr %s276, 16
        %s278 = scalar_lea.vmem [#allocation2], %s277
        // Predicated region
        $region45: #{tpu_custom_call.1} parent=43 // pred_check
          %p279 = pneg %p59
        $region46: #{tpu_custom_call.1} parent=43 // pred_check_branch
          %281 = sbr.rel (%p279) target = $region48
        $region47: #{tpu_custom_call.1} parent=43 // pred_region
          %282 = dma.done %s275, 256
        $region48: #{tpu_custom_call.1} parent=43 // pred_fallthru
          _
        // Predicated region
        $region49: #{tpu_custom_call.1} parent=43 // pred_check
          %p283 = pneg %p80
        $region50: #{tpu_custom_call.1} parent=43 // pred_check_branch
          %285 = sbr.rel (%p283) target = $region52
        $region51: #{tpu_custom_call.1} parent=43 // pred_region
          %286 = dma.done [#allocation6], 64
        $region52: #{tpu_custom_call.1} parent=43 // pred_fallthru
          _
        // Predicated region
        $region53: #{tpu_custom_call.1} parent=43 // pred_check
          %p287 = pneg %p101
        $region54: #{tpu_custom_call.1} parent=43 // pred_check_branch
          %289 = sbr.rel (%p287) target = $region56
        $region55: #{tpu_custom_call.1} parent=43 // pred_region
          %290 = dma.done [#allocation6], 384
        $region56: #{tpu_custom_call.1} parent=43 // pred_fallthru
          _
        %s291 = sand.u32 %s46, 1
        %s292 = scalar_lea.sflag [#allocation3], %s291
        %s293 = sand.u32 %s46, 1
        %s294 = smul.addr %s293, 16
        %s295 = scalar_lea.vmem [#allocation2], %s294
        %p296 = pneg %p59
        %p297 = pneg %p56
        %p298 = pneg %p80
        %p299 = pneg %p77
        %p300 = pneg %p101
        %p301 = pneg %p98
        %p302 = pneg %p122
        %p303 = pneg %p119
        %p304 = pneg %p143
        %p305 = pneg %p140
        %p306 = pneg %p164
        %p307 = pneg %p161
        %p308 = pneg %p192
        %p309 = pneg %p189
        %s310 = sand.u32 %s179, 1
        %s311 = scalar_lea.sflag [#allocation4], %s310
        %s312 = sand.u32 %s179, 1
        %s313 = smul.addr %s312, 8
        %s314 = scalar_lea.vmem [#allocation8], %s313
        %v315 = vld [vmem:[%s278] sm:$0xff]
        %v316 = vld [vmem:[%s278 + $0x8] sm:$0xff]
        %v317 = vld [vmem:[#allocation5] sm:$0x3]
        %s318 = scalar_lea.vmem [#allocation5], 2
        %v319 = vld [vmem:[%s318] sm:$0x3]
        %s320 = smul.u32 %s29, 8
        %v321 = vstv %s320
        %v322 = vadd.s32 %v321, %v317
        %v323 = vsub.s32 %v322, 2
        %vm324 = vcmp.ge.s32.totalorder %v319, 1
        %vm325 = vcmp.le.s32.totalorder %v319, 16
        %vm326 = vmand %vm324, %vm325
        %vm327 = vcmp.ge.s32.totalorder %v319, 4294967295
        %vm328 = vcmp.le.s32.totalorder %v319, 14
        %vm329 = vmand %vm327, %vm328
        %vm330 = vcmp.ge.s32.totalorder %v323, 1
        %vm331 = vcmp.le.s32.totalorder %v323, 16
        %vm332 = vmand %vm330, %vm331
        %vm333 = vcmp.ge.s32.totalorder %v323, 4294967295
        %vm334 = vcmp.le.s32.totalorder %v323, 14
        %vm335 = vmand %vm333, %vm334
        %vm336 = vcmask 1048064
        %337 = vrot.lane.b32.xlu0 %v315, 64
        %v338 = vpop.permute.xlu0 %337
        %v339 = vsel %vm336, %v338, %v316
        %340 = vrot.lane.b32.xlu0 %v339, 64
        %v341 = vpop.permute.xlu0 %340
        %v342 = vsel %vm336, %v341, %v338
        %v343 = vsel %vm326, 1, 0
        %v344 = vlaneseq
        %v345 = vshrl.u32 %v344, 7
        %v346 = vsub.s32 0, %v345
        %v347 = vrot.slane %v343, %v346
        %v348 = vlaneseq
        %v349 = vshrl.u32 %v348, 7
        %v350 = vsub.s32 1, %v349
        %v351 = vrot.slane %v343, %v350
        %vm352 = vcmp.eq.s32.totalorder %v347, 1
        %vm353 = vcmp.eq.s32.totalorder %v351, 1
        %356 = vrot.lane.b32.xlu0 %v339, 81
        %v357 = vpop.permute.xlu0 %356
        %358 = vrot.lane.b32.xlu0 %v342, 81
        %v359 = vpop.permute.xlu0 %358
        %vm360 = vcmask 662528
        %v361 = vsel %vm360, %v357, %v359
        %v364 = vsel %vm352, %v361, 0.0
        %v365 = vsel %vm353, %v359, 0.0
        %v366 = vsel %vm329, 1, 0
        %v367 = vlaneseq
        %v368 = vshrl.u32 %v367, 7
        %v369 = vsub.s32 0, %v368
        %v370 = vrot.slane %v366, %v369
        %v371 = vlaneseq
        %v372 = vshrl.u32 %v371, 7
        %v373 = vsub.s32 1, %v372
        %v374 = vrot.slane %v366, %v373
        %vm375 = vcmp.eq.s32.totalorder %v370, 1
        %vm376 = vcmp.eq.s32.totalorder %v374, 1
        %377 = vrot.lane.b32.xlu0 %v339, 79
        %v378 = vpop.permute.xlu0 %377
        %379 = vrot.lane.b32.xlu0 %v342, 79
        %v380 = vpop.permute.xlu0 %379
        %vm381 = vcmask 646144
        %v382 = vsel %vm381, %v378, %v380
        %v385 = vsel %vm375, %v382, 0.0
        %v386 = vsel %vm376, %v380, 0.0
        %387 = vrot.lane.b32.xlu0 %v339, 80
        %v388 = vpop.permute.xlu0 %387
        %389 = vrot.lane.b32.xlu0 %v342, 80
        %v390 = vpop.permute.xlu0 %389
        %vm391 = vcmask 654336
        %v392 = vsel %vm391, %v388, %v390
        %v395 = vld [vmem:[#allocation7] sm:$0xff]
        %396 = vrot.lane.b32.xlu0 %v339, 65
        %v397 = vpop.permute.xlu0 %396
        %398 = vrot.lane.b32.xlu0 %v342, 65
        %v399 = vpop.permute.xlu0 %398
        %vm400 = vcmask 531456
        %v401 = vsel %vm400, %v397, %v399
        %v404 = vsel %vm352, %v401, 0.0
        %v405 = vsel %vm353, %v399, 0.0
        %407 = vrot.lane.b32.xlu0 %v315, 127
        %v408 = vpop.permute.xlu0 %407
        %409 = vrot.lane.b32.xlu0 %v339, 127
        %v410 = vpop.permute.xlu0 %409
        %vm411 = vcmask 1039360
        %v412 = vsel %vm411, %v408, %v410
        %v415 = vsel %vm375, %v412, 0.0
        %v416 = vsel %vm376, %v410, 0.0
        %s417 = scalar_lea.vmem [#allocation7], 8
        %v418 = vld [vmem:[%s417] sm:$0xff]
        %vm419 = vcmask 195584
        %v421 = vsel %vm419, %v418, 0
        %423 = vmatprep.subr.mxu0 0.0
        %424 = vmatpush1.msra.mxu0 0.0
        %425 = vmatprep.subr.mxu0 0.0
        %426 = vmatpush1.msra.mxu0 0.0
        %427 = vmatprep.subr.mxu0 0.0
        %428 = vmatpush1.msra.mxu0 0.0
        %429 = vmatprep.subr.mxu0 0.0
        %430 = vmatpush1.msra.mxu0 0.0
        %431 = vmatprep.subr.mxu0 0.0
        %432 = vmatpush1.msra.mxu0 0.0
        %433 = vmatprep.subr.mxu0 0.0
        %434 = vmatpush1.msra.mxu0 0.0
        %435 = vmatprep.subr.mxu0 0.0
        %436 = vmatpush1.msra.mxu0 0.0
        %437 = vmatprep.subr.mxu0 0.0
        %438 = vmatpush1.msra.mxu0 0.0
        %439 = vmatprep.subr.mxu0 0.0
        %440 = vmatpush1.msra.mxu0 0.0
        %441 = vmatprep.subr.mxu0 0.0
        %442 = vmatpush1.msra.mxu0 0.0
        %443 = vmatprep.subr.mxu0 0.0
        %444 = vmatpush1.msra.mxu0 0.0
        %445 = vmatprep.subr.mxu0 0.0
        %446 = vmatpush1.msra.mxu0 0.0
        %447 = vmatprep.subr.mxu0 0.0
        %448 = vmatpush1.msra.mxu0 0.0
        %449 = vmatprep.subr.mxu0 %v416
        %450 = vmatpush1.msra.mxu0 %v415
        %451 = vmatprep.subr.mxu0 %v316
        %452 = vmatpush1.msra.mxu0 %v315
        %453 = vmatprep.subr.mxu0 %v405
        %454 = vmatpush1.msra.mxu0 %v404
        %455 = vmatprep.subr.mxu0 0.0
        %456 = vmatpush2.msra.mxu0 0.0
        %457 = vmatprep.subr.mxu0 0.0
        %458 = vmatpush2.msra.mxu0 0.0
        %459 = vmatprep.subr.mxu0 0.0
        %460 = vmatpush2.msra.mxu0 0.0
        %461 = vmatprep.subr.mxu0 0.0
        %462 = vmatpush2.msra.mxu0 0.0
        %463 = vmatprep.subr.mxu0 0.0
        %464 = vmatpush2.msra.mxu0 0.0
        %465 = vmatprep.subr.mxu0 0.0
        %466 = vmatpush2.msra.mxu0 0.0
        %467 = vmatprep.subr.mxu0 0.0
        %468 = vmatpush2.msra.mxu0 0.0
        %469 = vmatprep.subr.mxu0 0.0
        %470 = vmatpush2.msra.mxu0 0.0
        %471 = vmatprep.subr.mxu0 0.0
        %472 = vmatpush2.msra.mxu0 0.0
        %473 = vmatprep.subr.mxu0 0.0
        %474 = vmatpush2.msra.mxu0 0.0
        %475 = vmatprep.subr.mxu0 0.0
        %476 = vmatpush2.msra.mxu0 0.0
        %477 = vmatprep.subr.mxu0 0.0
        %478 = vmatpush2.msra.mxu0 0.0
        %479 = vmatprep.subr.mxu0 0.0
        %480 = vmatpush2.msra.mxu0 0.0
        %481 = vmatprep.subr.mxu0 0.0
        %482 = vmatpush2.msra.mxu0 0.0
        %483 = vmatprep.subr.mxu0 0.0
        %484 = vmatpush2.msra.mxu0 0.0
        %485 = vmatprep.subr.mxu0 0.0
        %486 = vmatpush2.msra.mxu0 0.0
        %487 = vmatprep.mubr.f32.mxu0 0.0
        %488 = vmatmul.mubr.f32.gmra.mxu0 %v421
        %v489 = vpop.f32.mrf.mxu0
        %v490 = vadd.f32 0.0, %v489
        %v491 = vpop.f32.mrf.mxu0
        %v492 = vadd.f32 0.0, %v491
        %493 = vdwg.mxu0
        %v495 = vsel %vm419, %v395, 0
        %497 = vmatprep.subr.mxu0 0.0
        %498 = vmatpush1.msra.mxu0 0.0
        %499 = vmatprep.subr.mxu0 0.0
        %500 = vmatpush1.msra.mxu0 0.0
        %501 = vmatprep.subr.mxu0 0.0
        %502 = vmatpush1.msra.mxu0 0.0
        %503 = vmatprep.subr.mxu0 0.0
        %504 = vmatpush1.msra.mxu0 0.0
        %505 = vmatprep.subr.mxu0 0.0
        %506 = vmatpush1.msra.mxu0 0.0
        %507 = vmatprep.subr.mxu0 0.0
        %508 = vmatpush1.msra.mxu0 0.0
        %509 = vmatprep.subr.mxu0 0.0
        %510 = vmatpush1.msra.mxu0 0.0
        %511 = vmatprep.subr.mxu0 0.0
        %512 = vmatpush1.msra.mxu0 0.0
        %513 = vmatprep.subr.mxu0 0.0
        %514 = vmatpush1.msra.mxu0 0.0
        %515 = vmatprep.subr.mxu0 0.0
        %516 = vmatpush1.msra.mxu0 0.0
        %517 = vmatprep.subr.mxu0 0.0
        %518 = vmatpush1.msra.mxu0 0.0
        %519 = vmatprep.subr.mxu0 0.0
        %520 = vmatpush1.msra.mxu0 0.0
        %521 = vmatprep.subr.mxu0 0.0
        %522 = vmatpush1.msra.mxu0 0.0
        %523 = vmatprep.subr.mxu0 %v386
        %524 = vmatpush1.msra.mxu0 %v385
        %525 = vmatprep.subr.mxu0 %v390
        %526 = vmatpush1.msra.mxu0 %v392
        %527 = vmatprep.subr.mxu0 %v365
        %528 = vmatpush1.msra.mxu0 %v364
        %529 = vmatprep.subr.mxu0 0.0
        %530 = vmatpush2.msra.mxu0 0.0
        %531 = vmatprep.subr.mxu0 0.0
        %532 = vmatpush2.msra.mxu0 0.0
        %533 = vmatprep.subr.mxu0 0.0
        %534 = vmatpush2.msra.mxu0 0.0
        %535 = vmatprep.subr.mxu0 0.0
        %536 = vmatpush2.msra.mxu0 0.0
        %537 = vmatprep.subr.mxu0 0.0
        %538 = vmatpush2.msra.mxu0 0.0
        %539 = vmatprep.subr.mxu0 0.0
        %540 = vmatpush2.msra.mxu0 0.0
        %541 = vmatprep.subr.mxu0 0.0
        %542 = vmatpush2.msra.mxu0 0.0
        %543 = vmatprep.subr.mxu0 0.0
        %544 = vmatpush2.msra.mxu0 0.0
        %545 = vmatprep.subr.mxu0 0.0
        %546 = vmatpush2.msra.mxu0 0.0
        %547 = vmatprep.subr.mxu0 0.0
        %548 = vmatpush2.msra.mxu0 0.0
        %549 = vmatprep.subr.mxu0 0.0
        %550 = vmatpush2.msra.mxu0 0.0
        %551 = vmatprep.subr.mxu0 0.0
        %552 = vmatpush2.msra.mxu0 0.0
        %553 = vmatprep.subr.mxu0 0.0
        %554 = vmatpush2.msra.mxu0 0.0
        %555 = vmatprep.subr.mxu0 0.0
        %556 = vmatpush2.msra.mxu0 0.0
        %557 = vmatprep.subr.mxu0 0.0
        %558 = vmatpush2.msra.mxu0 0.0
        %559 = vmatprep.subr.mxu0 0.0
        %560 = vmatpush2.msra.mxu0 0.0
        %561 = vmatprep.mubr.f32.mxu0 0.0
        %562 = vmatmul.mubr.f32.gmra.mxu0 %v495
        %v563 = vpop.f32.mrf.mxu0
        %v564 = vadd.f32 %v490, %v563
        %v565 = vpop.f32.mrf.mxu0
        %v566 = vadd.f32 %v492, %v565
        %567 = vdwg.mxu0
        %568 = vrot.lane.b32.xlu0 %v315, 113
        %v569 = vpop.permute.xlu0 %568
        %570 = vrot.lane.b32.xlu0 %v339, 113
        %v571 = vpop.permute.xlu0 %570
        %vm572 = vcmask 924672
        %v573 = vsel %vm572, %v569, %v571
        %v576 = vsel %vm352, %v573, 0.0
        %v577 = vsel %vm353, %v571, 0.0
        %578 = vrot.lane.b32.xlu0 %v315, 111
        %v579 = vpop.permute.xlu0 %578
        %580 = vrot.lane.b32.xlu0 %v339, 111
        %v581 = vpop.permute.xlu0 %580
        %vm582 = vcmask 908288
        %v583 = vsel %vm582, %v579, %v581
        %v586 = vsel %vm375, %v583, 0.0
        %v587 = vsel %vm376, %v581, 0.0
        %588 = vrot.lane.b32.xlu0 %v315, 112
        %v589 = vpop.permute.xlu0 %588
        %590 = vrot.lane.b32.xlu0 %v339, 112
        %v591 = vpop.permute.xlu0 %590
        %vm592 = vcmask 916480
        %v593 = vsel %vm592, %v589, %v591
        %s596 = scalar_lea.vmem [#allocation7], 16
        %v597 = vld [vmem:[%s596] sm:$0xff]
        %v599 = vsel %vm419, %v597, 0
        %601 = vmatprep.subr.mxu0 0.0
        %602 = vmatpush1.msra.mxu0 0.0
        %603 = vmatprep.subr.mxu0 0.0
        %604 = vmatpush1.msra.mxu0 0.0
        %605 = vmatprep.subr.mxu0 0.0
        %606 = vmatpush1.msra.mxu0 0.0
        %607 = vmatprep.subr.mxu0 0.0
        %608 = vmatpush1.msra.mxu0 0.0
        %609 = vmatprep.subr.mxu0 0.0
        %610 = vmatpush1.msra.mxu0 0.0
        %611 = vmatprep.subr.mxu0 0.0
        %612 = vmatpush1.msra.mxu0 0.0
        %613 = vmatprep.subr.mxu0 0.0
        %614 = vmatpush1.msra.mxu0 0.0
        %615 = vmatprep.subr.mxu0 0.0
        %616 = vmatpush1.msra.mxu0 0.0
        %617 = vmatprep.subr.mxu0 0.0
        %618 = vmatpush1.msra.mxu0 0.0
        %619 = vmatprep.subr.mxu0 0.0
        %620 = vmatpush1.msra.mxu0 0.0
        %621 = vmatprep.subr.mxu0 0.0
        %622 = vmatpush1.msra.mxu0 0.0
        %623 = vmatprep.subr.mxu0 0.0
        %624 = vmatpush1.msra.mxu0 0.0
        %625 = vmatprep.subr.mxu0 0.0
        %626 = vmatpush1.msra.mxu0 0.0
        %627 = vmatprep.subr.mxu0 %v587
        %628 = vmatpush1.msra.mxu0 %v586
        %629 = vmatprep.subr.mxu0 %v591
        %630 = vmatpush1.msra.mxu0 %v593
        %631 = vmatprep.subr.mxu0 %v577
        %632 = vmatpush1.msra.mxu0 %v576
        %633 = vmatprep.subr.mxu0 0.0
        %634 = vmatpush2.msra.mxu0 0.0
        %635 = vmatprep.subr.mxu0 0.0
        %636 = vmatpush2.msra.mxu0 0.0
        %637 = vmatprep.subr.mxu0 0.0
        %638 = vmatpush2.msra.mxu0 0.0
        %639 = vmatprep.subr.mxu0 0.0
        %640 = vmatpush2.msra.mxu0 0.0
        %641 = vmatprep.subr.mxu0 0.0
        %642 = vmatpush2.msra.mxu0 0.0
        %643 = vmatprep.subr.mxu0 0.0
        %644 = vmatpush2.msra.mxu0 0.0
        %645 = vmatprep.subr.mxu0 0.0
        %646 = vmatpush2.msra.mxu0 0.0
        %647 = vmatprep.subr.mxu0 0.0
        %648 = vmatpush2.msra.mxu0 0.0
        %649 = vmatprep.subr.mxu0 0.0
        %650 = vmatpush2.msra.mxu0 0.0
        %651 = vmatprep.subr.mxu0 0.0
        %652 = vmatpush2.msra.mxu0 0.0
        %653 = vmatprep.subr.mxu0 0.0
        %654 = vmatpush2.msra.mxu0 0.0
        %655 = vmatprep.subr.mxu0 0.0
        %656 = vmatpush2.msra.mxu0 0.0
        %657 = vmatprep.subr.mxu0 0.0
        %658 = vmatpush2.msra.mxu0 0.0
        %659 = vmatprep.subr.mxu0 0.0
        %660 = vmatpush2.msra.mxu0 0.0
        %661 = vmatprep.subr.mxu0 0.0
        %662 = vmatpush2.msra.mxu0 0.0
        %663 = vmatprep.subr.mxu0 0.0
        %664 = vmatpush2.msra.mxu0 0.0
        %665 = vmatprep.mubr.f32.mxu0 0.0
        %666 = vmatmul.mubr.f32.gmra.mxu0 %v599
        %v667 = vpop.f32.mrf.mxu0
        %v668 = vadd.f32 0.0, %v667
        %v669 = vpop.f32.mrf.mxu0
        %v670 = vadd.f32 0.0, %v669
        %671 = vdwg.mxu0
        %v672 = vadd.f32 %v564, %v668
        %v673 = vadd.f32 %v566, %v670
        %v674 = vld [vmem:[%s3] sm:$0xff]
        %676 = vset.pattern.permute.xlu0 0
        %677 = vperm.xlu0 %676, %v674
        %v678 = vpop.permute.xlu0 %677
        %v680 = vadd.f32 %v672, %v678
        %v681 = vadd.f32 %v673, %v678
        %v682 = vmax.f32 %v680, 0.0
        %v683 = vmax.f32 %v681, 0.0
        %684 = vrot.lane.b32.xlu0 %v682, 64
        %v685 = vpop.permute.xlu0 %684
        %v686 = vsel %vm336, %v685, %v683
        %687 = vrot.lane.b32.xlu0 %v686, 64
        %v688 = vpop.permute.xlu0 %687
        %v689 = vsel %vm336, %v688, %v685
        %vm690 = vmand %vm332, %vm326
        %v691 = vsel %vm690, 1, 0
        %v692 = vlaneseq
        %v693 = vshrl.u32 %v692, 7
        %v694 = vsub.s32 0, %v693
        %v695 = vrot.slane %v691, %v694
        %v696 = vlaneseq
        %v697 = vshrl.u32 %v696, 7
        %v698 = vsub.s32 1, %v697
        %v699 = vrot.slane %v691, %v698
        %vm700 = vcmp.eq.s32.totalorder %v695, 1
        %vm701 = vcmp.eq.s32.totalorder %v699, 1
        %704 = vrot.lane.b32.xlu0 %v686, 81
        %v705 = vpop.permute.xlu0 %704
        %706 = vrot.lane.b32.xlu0 %v689, 81
        %v707 = vpop.permute.xlu0 %706
        %v708 = vsel %vm360, %v705, %v707
        %v711 = vsel %vm700, %v708, 0.0
        %v712 = vsel %vm701, %v707, 0.0
        %v713 = vsel %vm332, 1, 0
        %v714 = vlaneseq
        %v715 = vshrl.u32 %v714, 7
        %v716 = vsub.s32 0, %v715
        %v717 = vrot.slane %v713, %v716
        %v718 = vlaneseq
        %v719 = vshrl.u32 %v718, 7
        %v720 = vsub.s32 1, %v719
        %v721 = vrot.slane %v713, %v720
        %vm722 = vcmp.eq.s32.totalorder %v717, 1
        %vm723 = vcmp.eq.s32.totalorder %v721, 1
        %724 = vrot.lane.b32.xlu0 %v686, 80
        %v725 = vpop.permute.xlu0 %724
        %726 = vrot.lane.b32.xlu0 %v689, 80
        %v727 = vpop.permute.xlu0 %726
        %v728 = vsel %vm391, %v725, %v727
        %v731 = vsel %vm722, %v728, 0.0
        %v732 = vsel %vm723, %v727, 0.0
        %vm733 = vmand %vm332, %vm329
        %v734 = vsel %vm733, 1, 0
        %v735 = vlaneseq
        %v736 = vshrl.u32 %v735, 7
        %v737 = vsub.s32 0, %v736
        %v738 = vrot.slane %v734, %v737
        %v739 = vlaneseq
        %v740 = vshrl.u32 %v739, 7
        %v741 = vsub.s32 1, %v740
        %v742 = vrot.slane %v734, %v741
        %vm743 = vcmp.eq.s32.totalorder %v738, 1
        %vm744 = vcmp.eq.s32.totalorder %v742, 1
        %745 = vrot.lane.b32.xlu0 %v686, 79
        %v746 = vpop.permute.xlu0 %745
        %747 = vrot.lane.b32.xlu0 %v689, 79
        %v748 = vpop.permute.xlu0 %747
        %v749 = vsel %vm381, %v746, %v748
        %v752 = vsel %vm743, %v749, 0.0
        %v753 = vsel %vm744, %v748, 0.0
        %v754 = vld [vmem:[%s4] sm:$0xff]
        %755 = vrot.lane.b32.xlu0 %v686, 65
        %v756 = vpop.permute.xlu0 %755
        %757 = vrot.lane.b32.xlu0 %v689, 65
        %v758 = vpop.permute.xlu0 %757
        %v759 = vsel %vm400, %v756, %v758
        %v762 = vsel %vm352, %v759, 0.0
        %v763 = vsel %vm353, %v758, 0.0
        %765 = vrot.lane.b32.xlu0 %v682, 127
        %v766 = vpop.permute.xlu0 %765
        %767 = vrot.lane.b32.xlu0 %v686, 127
        %v768 = vpop.permute.xlu0 %767
        %v769 = vsel %vm411, %v766, %v768
        %v772 = vsel %vm375, %v769, 0.0
        %v773 = vsel %vm376, %v768, 0.0
        %s774 = scalar_lea.vmem %s4, 8
        %v775 = vld [vmem:[%s774] sm:$0xff]
        %v777 = vsel %vm419, %v775, 0
        %779 = vmatprep.subr.mxu0 0.0
        %780 = vmatpush1.msra.mxu0 0.0
        %781 = vmatprep.subr.mxu0 0.0
        %782 = vmatpush1.msra.mxu0 0.0
        %783 = vmatprep.subr.mxu0 0.0
        %784 = vmatpush1.msra.mxu0 0.0
        %785 = vmatprep.subr.mxu0 0.0
        %786 = vmatpush1.msra.mxu0 0.0
        %787 = vmatprep.subr.mxu0 0.0
        %788 = vmatpush1.msra.mxu0 0.0
        %789 = vmatprep.subr.mxu0 0.0
        %790 = vmatpush1.msra.mxu0 0.0
        %791 = vmatprep.subr.mxu0 0.0
        %792 = vmatpush1.msra.mxu0 0.0
        %793 = vmatprep.subr.mxu0 0.0
        %794 = vmatpush1.msra.mxu0 0.0
        %795 = vmatprep.subr.mxu0 0.0
        %796 = vmatpush1.msra.mxu0 0.0
        %797 = vmatprep.subr.mxu0 0.0
        %798 = vmatpush1.msra.mxu0 0.0
        %799 = vmatprep.subr.mxu0 0.0
        %800 = vmatpush1.msra.mxu0 0.0
        %801 = vmatprep.subr.mxu0 0.0
        %802 = vmatpush1.msra.mxu0 0.0
        %803 = vmatprep.subr.mxu0 0.0
        %804 = vmatpush1.msra.mxu0 0.0
        %805 = vmatprep.subr.mxu0 %v773
        %806 = vmatpush1.msra.mxu0 %v772
        %807 = vmatprep.subr.mxu0 %v683
        %808 = vmatpush1.msra.mxu0 %v682
        %809 = vmatprep.subr.mxu0 %v763
        %810 = vmatpush1.msra.mxu0 %v762
        %811 = vmatprep.subr.mxu0 0.0
        %812 = vmatpush2.msra.mxu0 0.0
        %813 = vmatprep.subr.mxu0 0.0
        %814 = vmatpush2.msra.mxu0 0.0
        %815 = vmatprep.subr.mxu0 0.0
        %816 = vmatpush2.msra.mxu0 0.0
        %817 = vmatprep.subr.mxu0 0.0
        %818 = vmatpush2.msra.mxu0 0.0
        %819 = vmatprep.subr.mxu0 0.0
        %820 = vmatpush2.msra.mxu0 0.0
        %821 = vmatprep.subr.mxu0 0.0
        %822 = vmatpush2.msra.mxu0 0.0
        %823 = vmatprep.subr.mxu0 0.0
        %824 = vmatpush2.msra.mxu0 0.0
        %825 = vmatprep.subr.mxu0 0.0
        %826 = vmatpush2.msra.mxu0 0.0
        %827 = vmatprep.subr.mxu0 0.0
        %828 = vmatpush2.msra.mxu0 0.0
        %829 = vmatprep.subr.mxu0 0.0
        %830 = vmatpush2.msra.mxu0 0.0
        %831 = vmatprep.subr.mxu0 0.0
        %832 = vmatpush2.msra.mxu0 0.0
        %833 = vmatprep.subr.mxu0 0.0
        %834 = vmatpush2.msra.mxu0 0.0
        %835 = vmatprep.subr.mxu0 0.0
        %836 = vmatpush2.msra.mxu0 0.0
        %837 = vmatprep.subr.mxu0 0.0
        %838 = vmatpush2.msra.mxu0 0.0
        %839 = vmatprep.subr.mxu0 0.0
        %840 = vmatpush2.msra.mxu0 0.0
        %841 = vmatprep.subr.mxu0 0.0
        %842 = vmatpush2.msra.mxu0 0.0
        %843 = vmatprep.mubr.f32.mxu0 0.0
        %844 = vmatmul.mubr.f32.gmra.mxu0 %v777
        %v845 = vpop.f32.mrf.mxu0
        %v846 = vadd.f32 0.0, %v845
        %v847 = vpop.f32.mrf.mxu0
        %v848 = vadd.f32 0.0, %v847
        %849 = vdwg.mxu0
        %v851 = vsel %vm419, %v754, 0
        %853 = vmatprep.subr.mxu0 0.0
        %854 = vmatpush1.msra.mxu0 0.0
        %855 = vmatprep.subr.mxu0 0.0
        %856 = vmatpush1.msra.mxu0 0.0
        %857 = vmatprep.subr.mxu0 0.0
        %858 = vmatpush1.msra.mxu0 0.0
        %859 = vmatprep.subr.mxu0 0.0
        %860 = vmatpush1.msra.mxu0 0.0
        %861 = vmatprep.subr.mxu0 0.0
        %862 = vmatpush1.msra.mxu0 0.0
        %863 = vmatprep.subr.mxu0 0.0
        %864 = vmatpush1.msra.mxu0 0.0
        %865 = vmatprep.subr.mxu0 0.0
        %866 = vmatpush1.msra.mxu0 0.0
        %867 = vmatprep.subr.mxu0 0.0
        %868 = vmatpush1.msra.mxu0 0.0
        %869 = vmatprep.subr.mxu0 0.0
        %870 = vmatpush1.msra.mxu0 0.0
        %871 = vmatprep.subr.mxu0 0.0
        %872 = vmatpush1.msra.mxu0 0.0
        %873 = vmatprep.subr.mxu0 0.0
        %874 = vmatpush1.msra.mxu0 0.0
        %875 = vmatprep.subr.mxu0 0.0
        %876 = vmatpush1.msra.mxu0 0.0
        %877 = vmatprep.subr.mxu0 0.0
        %878 = vmatpush1.msra.mxu0 0.0
        %879 = vmatprep.subr.mxu0 %v753
        %880 = vmatpush1.msra.mxu0 %v752
        %881 = vmatprep.subr.mxu0 %v732
        %882 = vmatpush1.msra.mxu0 %v731
        %883 = vmatprep.subr.mxu0 %v712
        %884 = vmatpush1.msra.mxu0 %v711
        %885 = vmatprep.subr.mxu0 0.0
        %886 = vmatpush2.msra.mxu0 0.0
        %887 = vmatprep.subr.mxu0 0.0
        %888 = vmatpush2.msra.mxu0 0.0
        %889 = vmatprep.subr.mxu0 0.0
        %890 = vmatpush2.msra.mxu0 0.0
        %891 = vmatprep.subr.mxu0 0.0
        %892 = vmatpush2.msra.mxu0 0.0
        %893 = vmatprep.subr.mxu0 0.0
        %894 = vmatpush2.msra.mxu0 0.0
        %895 = vmatprep.subr.mxu0 0.0
        %896 = vmatpush2.msra.mxu0 0.0
        %897 = vmatprep.subr.mxu0 0.0
        %898 = vmatpush2.msra.mxu0 0.0
        %899 = vmatprep.subr.mxu0 0.0
        %900 = vmatpush2.msra.mxu0 0.0
        %901 = vmatprep.subr.mxu0 0.0
        %902 = vmatpush2.msra.mxu0 0.0
        %903 = vmatprep.subr.mxu0 0.0
        %904 = vmatpush2.msra.mxu0 0.0
        %905 = vmatprep.subr.mxu0 0.0
        %906 = vmatpush2.msra.mxu0 0.0
        %907 = vmatprep.subr.mxu0 0.0
        %908 = vmatpush2.msra.mxu0 0.0
        %909 = vmatprep.subr.mxu0 0.0
        %910 = vmatpush2.msra.mxu0 0.0
        %911 = vmatprep.subr.mxu0 0.0
        %912 = vmatpush2.msra.mxu0 0.0
        %913 = vmatprep.subr.mxu0 0.0
        %914 = vmatpush2.msra.mxu0 0.0
        %915 = vmatprep.subr.mxu0 0.0
        %916 = vmatpush2.msra.mxu0 0.0
        %917 = vmatprep.mubr.f32.mxu0 0.0
        %918 = vmatmul.mubr.f32.gmra.mxu0 %v851
        %v919 = vpop.f32.mrf.mxu0
        %v920 = vadd.f32 %v846, %v919
        %v921 = vpop.f32.mrf.mxu0
        %v922 = vadd.f32 %v848, %v921
        %923 = vdwg.mxu0
        %vm924 = vmand %vm335, %vm326
        %v925 = vsel %vm924, 1, 0
        %v926 = vlaneseq
        %v927 = vshrl.u32 %v926, 7
        %v928 = vsub.s32 0, %v927
        %v929 = vrot.slane %v925, %v928
        %v930 = vlaneseq
        %v931 = vshrl.u32 %v930, 7
        %v932 = vsub.s32 1, %v931
        %v933 = vrot.slane %v925, %v932
        %vm934 = vcmp.eq.s32.totalorder %v929, 1
        %vm935 = vcmp.eq.s32.totalorder %v933, 1
        %936 = vrot.lane.b32.xlu0 %v682, 113
        %v937 = vpop.permute.xlu0 %936
        %938 = vrot.lane.b32.xlu0 %v686, 113
        %v939 = vpop.permute.xlu0 %938
        %v940 = vsel %vm572, %v937, %v939
        %v943 = vsel %vm934, %v940, 0.0
        %v944 = vsel %vm935, %v939, 0.0
        %v945 = vsel %vm335, 1, 0
        %v946 = vlaneseq
        %v947 = vshrl.u32 %v946, 7
        %v948 = vsub.s32 0, %v947
        %v949 = vrot.slane %v945, %v948
        %v950 = vlaneseq
        %v951 = vshrl.u32 %v950, 7
        %v952 = vsub.s32 1, %v951
        %v953 = vrot.slane %v945, %v952
        %vm954 = vcmp.eq.s32.totalorder %v949, 1
        %vm955 = vcmp.eq.s32.totalorder %v953, 1
        %956 = vrot.lane.b32.xlu0 %v682, 112
        %v957 = vpop.permute.xlu0 %956
        %958 = vrot.lane.b32.xlu0 %v686, 112
        %v959 = vpop.permute.xlu0 %958
        %v960 = vsel %vm592, %v957, %v959
        %v963 = vsel %vm954, %v960, 0.0
        %v964 = vsel %vm955, %v959, 0.0
        %vm965 = vmand %vm335, %vm329
        %v966 = vsel %vm965, 1, 0
        %v967 = vlaneseq
        %v968 = vshrl.u32 %v967, 7
        %v969 = vsub.s32 0, %v968
        %v970 = vrot.slane %v966, %v969
        %v971 = vlaneseq
        %v972 = vshrl.u32 %v971, 7
        %v973 = vsub.s32 1, %v972
        %v974 = vrot.slane %v966, %v973
        %vm975 = vcmp.eq.s32.totalorder %v970, 1
        %vm976 = vcmp.eq.s32.totalorder %v974, 1
        %977 = vrot.lane.b32.xlu0 %v682, 111
        %v978 = vpop.permute.xlu0 %977
        %979 = vrot.lane.b32.xlu0 %v686, 111
        %v980 = vpop.permute.xlu0 %979
        %v981 = vsel %vm582, %v978, %v980
        %v984 = vsel %vm975, %v981, 0.0
        %v985 = vsel %vm976, %v980, 0.0
        %s986 = scalar_lea.vmem %s4, 16
        %v987 = vld [vmem:[%s986] sm:$0xff]
        %v989 = vsel %vm419, %v987, 0
        %991 = vmatprep.subr.mxu0 0.0
        %992 = vmatpush1.msra.mxu0 0.0
        %993 = vmatprep.subr.mxu0 0.0
        %994 = vmatpush1.msra.mxu0 0.0
        %995 = vmatprep.subr.mxu0 0.0
        %996 = vmatpush1.msra.mxu0 0.0
        %997 = vmatprep.subr.mxu0 0.0
        %998 = vmatpush1.msra.mxu0 0.0
        %999 = vmatprep.subr.mxu0 0.0
        %1000 = vmatpush1.msra.mxu0 0.0
        %1001 = vmatprep.subr.mxu0 0.0
        %1002 = vmatpush1.msra.mxu0 0.0
        %1003 = vmatprep.subr.mxu0 0.0
        %1004 = vmatpush1.msra.mxu0 0.0
        %1005 = vmatprep.subr.mxu0 0.0
        %1006 = vmatpush1.msra.mxu0 0.0
        %1007 = vmatprep.subr.mxu0 0.0
        %1008 = vmatpush1.msra.mxu0 0.0
        %1009 = vmatprep.subr.mxu0 0.0
        %1010 = vmatpush1.msra.mxu0 0.0
        %1011 = vmatprep.subr.mxu0 0.0
        %1012 = vmatpush1.msra.mxu0 0.0
        %1013 = vmatprep.subr.mxu0 0.0
        %1014 = vmatpush1.msra.mxu0 0.0
        %1015 = vmatprep.subr.mxu0 0.0
        %1016 = vmatpush1.msra.mxu0 0.0
        %1017 = vmatprep.subr.mxu0 %v985
        %1018 = vmatpush1.msra.mxu0 %v984
        %1019 = vmatprep.subr.mxu0 %v964
        %1020 = vmatpush1.msra.mxu0 %v963
        %1021 = vmatprep.subr.mxu0 %v944
        %1022 = vmatpush1.msra.mxu0 %v943
        %1023 = vmatprep.subr.mxu0 0.0
        %1024 = vmatpush2.msra.mxu0 0.0
        %1025 = vmatprep.subr.mxu0 0.0
        %1026 = vmatpush2.msra.mxu0 0.0
        %1027 = vmatprep.subr.mxu0 0.0
        %1028 = vmatpush2.msra.mxu0 0.0
        %1029 = vmatprep.subr.mxu0 0.0
        %1030 = vmatpush2.msra.mxu0 0.0
        %1031 = vmatprep.subr.mxu0 0.0
        %1032 = vmatpush2.msra.mxu0 0.0
        %1033 = vmatprep.subr.mxu0 0.0
        %1034 = vmatpush2.msra.mxu0 0.0
        %1035 = vmatprep.subr.mxu0 0.0
        %1036 = vmatpush2.msra.mxu0 0.0
        %1037 = vmatprep.subr.mxu0 0.0
        %1038 = vmatpush2.msra.mxu0 0.0
        %1039 = vmatprep.subr.mxu0 0.0
        %1040 = vmatpush2.msra.mxu0 0.0
        %1041 = vmatprep.subr.mxu0 0.0
        %1042 = vmatpush2.msra.mxu0 0.0
        %1043 = vmatprep.subr.mxu0 0.0
        %1044 = vmatpush2.msra.mxu0 0.0
        %1045 = vmatprep.subr.mxu0 0.0
        %1046 = vmatpush2.msra.mxu0 0.0
        %1047 = vmatprep.subr.mxu0 0.0
        %1048 = vmatpush2.msra.mxu0 0.0
        %1049 = vmatprep.subr.mxu0 0.0
        %1050 = vmatpush2.msra.mxu0 0.0
        %1051 = vmatprep.subr.mxu0 0.0
        %1052 = vmatpush2.msra.mxu0 0.0
        %1053 = vmatprep.subr.mxu0 0.0
        %1054 = vmatpush2.msra.mxu0 0.0
        %1055 = vmatprep.mubr.f32.mxu0 0.0
        %1056 = vmatmul.mubr.f32.gmra.mxu0 %v989
        %v1057 = vpop.f32.mrf.mxu0
        %v1058 = vadd.f32 0.0, %v1057
        %v1059 = vpop.f32.mrf.mxu0
        %v1060 = vadd.f32 0.0, %v1059
        %1061 = vdwg.mxu0
        %v1062 = vadd.f32 %v920, %v1058
        %v1063 = vadd.f32 %v922, %v1060
        %v1064 = vld [vmem:[%s5] sm:$0xff]
        %1066 = vset.pattern.permute.xlu0 0
        %1067 = vperm.xlu0 %1066, %v1064
        %v1068 = vpop.permute.xlu0 %1067
        %v1070 = vadd.f32 %v1062, %v1068
        %v1071 = vadd.f32 %v1063, %v1068
        %v1072 = vadd.f32 %v315, %v1070
        %v1073 = vadd.f32 %v316, %v1071
        %1076 = vrot.lane.b32.xlu0 %v1072, 96
        %v1077 = vpop.permute.xlu0 %1076
        %1078 = vrot.lane.b32.xlu0 %v1073, 96
        %v1079 = vpop.permute.xlu0 %1078
        %vm1080 = vcmask 785408
        %v1081 = vsel %vm1080, %v1077, %v1079
        %1083 = vst [vmem:[%s314] sm:$0xff] %v1081
        %s1084 = sand.u32 %s179, 1
        %s1085 = scalar_lea.sflag [#allocation4], %s1084
        %s1086 = sand.u32 %s179, 1
        %s1087 = smul.addr %s1086, 8
        %s1088 = scalar_lea.vmem [#allocation8], %s1087
        // Predicated region
        $region57: #{tpu_custom_call.1} parent=43 // pred_check
          %p1089 = pneg %p189
        $region58: #{tpu_custom_call.1} parent=43 // pred_check_branch
          %1091 = sbr.rel (%p1089) target = $region60
        $region59: #{tpu_custom_call.1} parent=43 // pred_region
          %s1093 = ssub.s32 128, 128
          %1094 = vsyncadd %s1085, %s1093
          %s1095 = smul.addr %s28, 2
          %s1096 = sadd.s32 %s29, %s1095
          %s1097 = smul.addr %s1096, 128
          %s1098 = scalar_lea.hbm %s6, %s1097
          %s1100 = sshll.u32 %s1088, 4
          %s1101 = int_to_ptr.vmem [resolvable:$true] %s1100
          %1103 = dma.vmem_to_hbm [thread:$0]  %s1101, 128, %s1098, %s1085
        $region60: #{tpu_custom_call.1} parent=43 // pred_fallthru
          _
      $region44: #{tpu_custom_call.1} parent=5 // pred_fallthru
        _
      %p1104 = scmp.le.s32.totalorder 2, %s19
      // Predicated region
      $region61: #{tpu_custom_call.1} parent=5 // pred_check
        %p1105 = pneg %p1104
      $region62: #{tpu_custom_call.1} parent=5 // pred_check_branch
        %1107 = sbr.rel (%p1105) target = $region64
      $region63: #{tpu_custom_call.1} parent=5 // pred_region
        %s1108 = ssub.s32 %s19, 2
        // Predicated region
        $region65: #{tpu_custom_call.1} parent=63 // pred_check
          %p1109 = pneg %p195
        $region66: #{tpu_custom_call.1} parent=63 // pred_check_branch
          %1111 = sbr.rel (%p1109) target = $region68
        $region67: #{tpu_custom_call.1} parent=63 // pred_region
          %s1112 = sand.u32 %s180, 1
          %s1113 = scalar_lea.sflag [#allocation4], %s1112
          %s1114 = sand.u32 %s180, 1
          %s1115 = smul.addr %s1114, 8
          %s1116 = scalar_lea.vmem [#allocation8], %s1115
          %1117 = dma.done %s1113, 128
        $region68: #{tpu_custom_call.1} parent=63 // pred_fallthru
          _
      $region64: #{tpu_custom_call.1} parent=5 // pred_fallthru
        _
    $region6: #{tpu_custom_call.1} parent=1 // loop_footer
      %s23 = sadd.s32 1, %s19
    $region7: #{tpu_custom_call.1} parent=1 // loop_footer_branch
      %18 = sbr.rel target = $region3
    $region8: #{tpu_custom_call.1} parent=1 // loop_exit
      _
    %1118 = vsyncpa [#allocation3], 1
    %s1119 = scalar_lea.sflag [#allocation3], 1
    %1120 = vsyncpa %s1119, 1
    %1121 = vsyncpa [#allocation6], 1
    %1122 = vsyncpa [#allocation4], 1
    %s1123 = scalar_lea.sflag [#allocation4], 1
    %1124 = vsyncpa %s1123, 1

</llo_original>
